<compile_context>
chip_gen: v7x
topology: tpu7x:2x2x1
jax: 0.10.0
libtpu: 0.0.40
codegen_flags: <defaults>
</compile_context>

<pallas_src>
import functools

import jax
import jax.numpy as jnp
from jax import lax
from jax.experimental import pallas as pl
from jax.experimental.pallas import tpu as pltpu

LANE = 128  # TPU lane width


def _round_up(x, m):
    return (x + m - 1) // m * m


def _make_kernel(th_out, w_out, k_tile, cout_pad, act_type, elu_alpha):
    """Single-dot-per-K-tile conv kernel: matmul + per-channel affine + activation."""
    m = th_out * w_out

    def kernel(p_ref, w_ref, scale_ref, shift_ref, o_ref, acc_ref):
        # p_ref:     (1, th_out, w_out, k_tile)   bf16 im2col patches
        # w_ref:     (k_tile, cout_pad)           bf16 folded weight matrix
        # scale_ref: (1, cout_pad)                f32 folded BN scale (ones if no BN)
        # shift_ref: (1, cout_pad)                f32 folded BN shift / conv bias
        # o_ref:     (1, th_out, w_out, cout_pad) out dtype (lane-dense last dim)
        # acc_ref:   (th_out*w_out, cout_pad)     f32 scratch accumulator
        k = pl.program_id(2)

        @pl.when(k == 0)
        def _():
            acc_ref[...] = jnp.zeros_like(acc_ref)

        # One MXU matmul per K-tile: (M, k_tile) x (k_tile, cout_pad), f32 accumulate.
        patch = p_ref[0].reshape(m, k_tile)
        acc_ref[...] += jnp.dot(patch, w_ref[...],
                                preferred_element_type=jnp.float32)

        @pl.when(k == pl.num_programs(2) - 1)
        def _():
            # Per-channel affine (folded bias / eval-mode BN) + activation, in f32.
            y = acc_ref[...] * scale_ref[...] + shift_ref[...]
            if act_type == "ReLU":
                y = jnp.maximum(y, 0.0)
            elif act_type == "ELU":
                # exp(min(y,0)) - 1 instead of expm1: identical at bf16 output precision.
                y = jnp.where(y > 0.0, y,
                              elu_alpha * (jnp.exp(jnp.minimum(y, 0.0)) - 1.0))
            # act_type None -> identity
            o_ref[0] = y.reshape(th_out, w_out, cout_pad).astype(o_ref.dtype)

    return kernel


def conv2d_module_forward(
    x_nchw,
    weight_oihw,
    *,
    stride=1,
    padding=0,
    dilation=1,
    groups=1,
    bias=None,
    bn_params=None,            # dict(gamma, beta, running_mean, running_var, eps) or None
    act_type="ReLU",           # "ReLU" | "ELU" | None
    elu_alpha=1.0,
    compute_dtype=jnp.bfloat16,
    out_dtype=jnp.bfloat16,
    m_target=256,              # target flattened M = th_out * w_out per matmul
    k_tile_max=512,            # max contraction tile (multiple of 128)
):
    """Pallas implementation of Conv2DModule.forward (groups=1, eval-mode BN)."""
    assert groups == 1, "grouped convolution not supported"
    assert act_type in ("ReLU", "ELU", None)
    n, cin, h, w = x_nchw.shape
    cout, cin_w, kh, kw = weight_oihw.shape
    assert cin == cin_w

    h_out = (h + 2 * padding - dilation * (kh - 1) - 1) // stride + 1
    w_out = (w + 2 * padding - dilation * (kw - 1) - 1) // stride + 1

    # ---- wrapper-side layout plumbing (pure data rearrangement, no compute) --------
    # NCHW -> NHWC, cast to bf16 once, spatial zero padding.
    x_nhwc = jnp.transpose(x_nchw, (0, 2, 3, 1)).astype(compute_dtype)
    x_pad = jnp.pad(x_nhwc, ((0, 0), (padding, padding), (padding, padding), (0, 0)))

    # im2col: one strided slice per tap, concatenated on the channel axis so the whole
    # kh*kw*cin contraction becomes a single lane-dense K dimension.
    h_span = (h_out - 1) * stride + 1
    w_span = (w_out - 1) * stride + 1
    taps = []
    for i in range(kh):
        for j in range(kw):
            h0, w0 = i * dilation, j * dilation
            taps.append(lax.slice(x_pad,
                                  (0, h0, w0, 0),
                                  (n, h0 + h_span, w0 + w_span, cin),
                                  (1, stride, stride, 1)))
    patches = jnp.concatenate(taps, axis=-1)          # (n, h_out, w_out, kh*kw*cin)

    k_real = kh * kw * cin
    k_pad = _round_up(k_real, LANE)
    k_tile = LANE
    for cand in (512, 256, 128):
        if cand <= k_tile_max and k_pad % cand == 0:
            k_tile = cand
            break
    k_steps = k_pad // k_tile

    cout_pad = _round_up(cout, LANE)

    # H tiling that never degrades on awkward sizes: pad h_out up to a tile multiple.
    th_out = min(h_out, max(1, m_target // w_out))
    h_tiles = (h_out + th_out - 1) // th_out
    h_pad_out = h_tiles * th_out

    patches = jnp.pad(
        patches,
        ((0, 0), (0, h_pad_out - h_out), (0, 0), (0, k_pad - k_real)),
    )

    # OIHW -> (kh, kw, cin, cout) -> (kh*kw*cin, cout): K index = (i*kw + j)*cin + c,
    # matching the tap concatenation order above.
    w_mat = jnp.transpose(weight_oihw, (2, 3, 1, 0)).reshape(k_real, cout)
    w_mat = jnp.pad(w_mat, ((0, k_pad - k_real), (0, cout_pad - cout))).astype(compute_dtype)

    # Fold conv bias + eval-mode BatchNorm into per-channel f32 scale/shift.
    scale = jnp.ones((cout,), jnp.float32)
    shift = jnp.zeros((cout,), jnp.float32)
    if bias is not None:
        shift = shift + bias.astype(jnp.float32)
    if bn_params is not None:
        inv_std = lax.rsqrt(bn_params["running_var"].astype(jnp.float32) + bn_params["eps"])
        g = bn_params["gamma"].astype(jnp.float32) * inv_std
        scale = scale * g
        shift = (shift - bn_params["running_mean"].astype(jnp.float32)) * g \
            + bn_params["beta"].astype(jnp.float32)
    scale = jnp.pad(scale, (0, cout_pad - cout), constant_values=1.0).reshape(1, cout_pad)
    shift = jnp.pad(shift, (0, cout_pad - cout)).reshape(1, cout_pad)

    # ---- Pallas kernel -------------------------------------------------------------
    kernel = _make_kernel(th_out, w_out, k_tile, cout_pad, act_type, elu_alpha)

    out_padded = pl.pallas_call(
        kernel,
        out_shape=jax.ShapeDtypeStruct((n, h_pad_out, w_out, cout_pad), out_dtype),
        grid_spec=pltpu.PrefetchScalarGridSpec(
            num_scalar_prefetch=0,
            grid=(n, h_tiles, k_steps),            # reduction (K) axis last
            in_specs=[
                pl.BlockSpec((1, th_out, w_out, k_tile), lambda b, t, k: (b, t, 0, k)),
                pl.BlockSpec((k_tile, cout_pad), lambda b, t, k: (k, 0)),
                pl.BlockSpec((1, cout_pad), lambda b, t, k: (0, 0)),
                pl.BlockSpec((1, cout_pad), lambda b, t, k: (0, 0)),
            ],
            # Lane-dense output tile (last dim = 128*k) -> unmasked stores.
            out_specs=pl.BlockSpec((1, th_out, w_out, cout_pad),
                                   lambda b, t, k: (b, t, 0, 0)),
            scratch_shapes=[pltpu.VMEM((th_out * w_out, cout_pad), jnp.float32)],
        ),
        compiler_params=pltpu.CompilerParams(
            dimension_semantics=("parallel", "parallel", "arbitrary"),
        ),
    )(patches, w_mat, scale, shift)

    # Drop channel / H padding and go back to NCHW (PyTorch convention).
    out = out_padded[:, :h_out, :, :cout]
    return jnp.transpose(out, (0, 3, 1, 2))


def _reference(x, weight, *, stride, padding, dilation, bias=None, bn_params=None,
               act_type="ReLU", elu_alpha=1.0, compute_dtype=jnp.bfloat16):
    y = lax.conv_general_dilated(
        x.astype(compute_dtype), weight.astype(compute_dtype),
        window_strides=(stride, stride),
        padding=[(padding, padding), (padding, padding)],
        rhs_dilation=(dilation, dilation),
        dimension_numbers=("NCHW", "OIHW", "NCHW"),
        preferred_element_type=jnp.float32,
    )
    if bias is not None:
        y = y + bias.astype(jnp.float32)[None, :, None, None]
    if bn_params is not None:
        inv_std = lax.rsqrt(bn_params["running_var"].astype(jnp.float32) + bn_params["eps"])
        g = (bn_params["gamma"].astype(jnp.float32) * inv_std)[None, :, None, None]
        mean = bn_params["running_mean"].astype(jnp.float32)[None, :, None, None]
        beta = bn_params["beta"].astype(jnp.float32)[None, :, None, None]
        y = (y - mean) * g + beta
    if act_type == "ReLU":
        y = jnp.maximum(y, 0.0)
    elif act_type == "ELU":
        y = jnp.where(y > 0.0, y, elu_alpha * jnp.expm1(y))
    return y


if __name__ == "__main__":
    keys = jax.random.split(jax.random.PRNGKey(0), 10)

    # ---- Config 1: Conv2DModule(4, 8, 3, padding=1, bias=False, norm_cfg=None,
    #                             act_cfg=dict(type='ReLU')) --------------------------
    cin, cout, ks = 4, 8, 3
    x = jax.random.normal(keys[0], (2, cin, 16, 16), dtype=jnp.float32)
    fan_in = cin * ks * ks
    bound = 1.0 / (fan_in ** 0.5)
    weight = jax.random.uniform(keys[1], (cout, cin, ks, ks),
                                minval=-bound, maxval=bound, dtype=jnp.float32)

    fwd = jax.jit(functools.partial(
        conv2d_module_forward, stride=1, padding=1, dilation=1,
        bias=None, bn_params=None, act_type="ReLU"))
    out = jax.block_until_ready(fwd(x, weight))
    ref = _reference(x, weight, stride=1, padding=1, dilation=1, act_type="ReLU")
    assert out.shape == ref.shape == (2, cout, 16, 16)
    # bf16 inputs, f32 accumulation, bf16 output rounding -> loose-ish tolerance.
    err = float(jnp.max(jnp.abs(out.astype(jnp.float32) - ref)))
    assert err < 3e-2, err

    # ---- Config 2: bias + eval-mode BatchNorm + ELU, stride 2 -----------------------
    x2 = jax.random.normal(keys[2], (2, cin, 16, 16), dtype=jnp.float32)
    w2 = jax.random.uniform(keys[3], (cout, cin, ks, ks),
                            minval=-0.2, maxval=0.2, dtype=jnp.float32)
    b2 = 0.1 * jax.random.normal(keys[4], (cout,), dtype=jnp.float32)
    bn = dict(
        gamma=1.0 + 0.1 * jax.random.normal(keys[5], (cout,), dtype=jnp.float32),
        beta=0.1 * jax.random.normal(keys[6], (cout,), dtype=jnp.float32),
        running_mean=0.1 * jax.random.normal(keys[7], (cout,), dtype=jnp.float32),
        running_var=0.5 + jnp.abs(jax.random.normal(keys[8], (cout,), dtype=jnp.float32)),
        eps=1e-5,
    )
    fwd2 = jax.jit(functools.partial(
        conv2d_module_forward, stride=2, padding=1, dilation=1, act_type="ELU"))
    out2 = jax.block_until_ready(fwd2(x2, w2, bias=b2, bn_params=bn))
    ref2 = _reference(x2, w2, stride=2, padding=1, dilation=1,
                      bias=b2, bn_params=bn, act_type="ELU")
    assert out2.shape == ref2.shape == (2, cout, 8, 8)
    err2 = float(jnp.max(jnp.abs(out2.astype(jnp.float32) - ref2)))
    assert err2 < 3e-2, err2

    print("KERNEL_OK")
</pallas_src>

<mosaic_0001>
module attributes {stable_mosaic.version = 11 : i64} {
  func.func @kernel(%arg0: i32, %arg1: i32, %arg2: i32, %arg3: memref<1x16x16x128xbf16, #tpu.memory_space<vmem>>, %arg4: memref<128x128xbf16, #tpu.memory_space<vmem>>, %arg5: memref<1x128xf32, #tpu.memory_space<vmem>>, %arg6: memref<1x128xf32, #tpu.memory_space<vmem>>, %arg7: memref<1x16x16x128xbf16, #tpu.memory_space<vmem>>, %arg8: memref<256x128xf32, #tpu.memory_space<vmem>>) attributes {dimension_semantics = [#tpu.dimension_semantics<parallel>, #tpu.dimension_semantics<parallel>, #tpu.dimension_semantics<arbitrary>], iteration_bounds = array<i64: 2, 1, 1>, scalar_prefetch = 0 : i64, scratch_operands = 1 : i64, tpu.core_type = #tpu.core_type<tc>, window_params = [{transform_indices = @transform_0, window_bounds = array<i64: 1, 16, 16, 128>}, {transform_indices = @transform_1, window_bounds = array<i64: 128, 128>}, {pipeline_mode = #tpu.pipeline_mode<synchronous>, transform_indices = @transform_2, window_bounds = array<i64: 1, 128>}, {pipeline_mode = #tpu.pipeline_mode<synchronous>, transform_indices = @transform_3, window_bounds = array<i64: 1, 128>}, {transform_indices = @transform_4, window_bounds = array<i64: 1, 16, 16, 128>}]} {
    %c0_i32 = arith.constant 0 : i32
    %0 = arith.cmpi eq, %arg2, %c0_i32 : i32
    %1 = arith.extui %0 : i1 to i32
    %c0_i32_0 = arith.constant 0 : i32
    %2 = arith.cmpi ne, %1, %c0_i32_0 : i32
    scf.if %2 {
      %cst_12 = arith.constant 0.000000e+00 : f32
      %14 = vector.broadcast %cst_12 : f32 to vector<256x128xf32>
      %c0_13 = arith.constant 0 : index
      %c0_14 = arith.constant 0 : index
      %15 = vector.load %arg8[%c0_13, %c0_14] : memref<256x128xf32, #tpu.memory_space<vmem>>, vector<256x128xf32>
      tpu.vector_store %arg8[%c0_13, %c0_14], %14 {strides = array<i32>} : memref<256x128xf32, #tpu.memory_space<vmem>>, vector<256x128xf32>,
    } else {
    }
    %c0 = arith.constant 0 : index
    %c0_1 = arith.constant 0 : index
    %c0_2 = arith.constant 0 : index
    %c0_3 = arith.constant 0 : index
    %3 = vector.load %arg3[%c0, %c0_1, %c0_2, %c0_3] : memref<1x16x16x128xbf16, #tpu.memory_space<vmem>>, vector<1x16x16x128xbf16>
    %4 = vector.shape_cast %3 : vector<1x16x16x128xbf16> to vector<16x16x128xbf16>
    %5 = vector.shape_cast %4 : vector<16x16x128xbf16> to vector<256x128xbf16>
    %c0_4 = arith.constant 0 : index
    %c0_5 = arith.constant 0 : index
    %6 = vector.load %arg8[%c0_4, %c0_5] : memref<256x128xf32, #tpu.memory_space<vmem>>, vector<256x128xf32>
    %c0_6 = arith.constant 0 : index
    %c0_7 = arith.constant 0 : index
    %7 = vector.load %arg4[%c0_6, %c0_7] : memref<128x128xbf16, #tpu.memory_space<vmem>>, vector<128x128xbf16>
    %cst = arith.constant dense<0.000000e+00> : vector<256x128xf32>
    %8 = tpu.matmul %5, %7, %cst {dimension_numbers = #tpu.dot_dimension_numbers<[1], [0], [0], [1], [0, 0, 1, 1], [], []>} : vector<256x128xbf16>, vector<128x128xbf16>, vector<256x128xf32> -> vector<256x128xf32>
    %9 = arith.addf %6, %8 : vector<256x128xf32>
    %c0_8 = arith.constant 0 : index
    %c0_9 = arith.constant 0 : index
    %10 = vector.load %arg8[%c0_8, %c0_9] : memref<256x128xf32, #tpu.memory_space<vmem>>, vector<256x128xf32>
    tpu.vector_store %arg8[%c0_8, %c0_9], %9 {strides = array<i32>} : memref<256x128xf32, #tpu.memory_space<vmem>>, vector<256x128xf32>,
    %c0_i32_10 = arith.constant 0 : i32
    %11 = arith.cmpi eq, %arg2, %c0_i32_10 : i32
    %12 = arith.extui %11 : i1 to i32
    %c0_i32_11 = arith.constant 0 : i32
    %13 = arith.cmpi ne, %12, %c0_i32_11 : i32
    scf.if %13 {
      %c0_12 = arith.constant 0 : index
      %c0_13 = arith.constant 0 : index
      %14 = vector.load %arg8[%c0_12, %c0_13] : memref<256x128xf32, #tpu.memory_space<vmem>>, vector<256x128xf32>
      %c0_14 = arith.constant 0 : index
      %c0_15 = arith.constant 0 : index
      %15 = vector.load %arg5[%c0_14, %c0_15] : memref<1x128xf32, #tpu.memory_space<vmem>>, vector<1x128xf32>
      %16 = vector.broadcast %15 : vector<1x128xf32> to vector<256x128xf32>
      %17 = arith.mulf %14, %16 : vector<256x128xf32>
      %c0_16 = arith.constant 0 : index
      %c0_17 = arith.constant 0 : index
      %18 = vector.load %arg6[%c0_16, %c0_17] : memref<1x128xf32, #tpu.memory_space<vmem>>, vector<1x128xf32>
      %19 = vector.broadcast %18 : vector<1x128xf32> to vector<256x128xf32>
      %20 = arith.addf %17, %19 : vector<256x128xf32>
      %cst_18 = arith.constant 0.000000e+00 : f32
      %21 = vector.broadcast %cst_18 : f32 to vector<256x128xf32>
      %22 = arith.maximumf %20, %21 : vector<256x128xf32>
      %23 = vector.shape_cast %22 : vector<256x128xf32> to vector<16x16x128xf32>
      %24 = arith.truncf %23 : vector<16x16x128xf32> to vector<16x16x128xbf16>
      %c0_19 = arith.constant 0 : index
      %c0_20 = arith.constant 0 : index
      %c0_21 = arith.constant 0 : index
      %c0_22 = arith.constant 0 : index
      %25 = vector.load %arg7[%c0_19, %c0_20, %c0_21, %c0_22] : memref<1x16x16x128xbf16, #tpu.memory_space<vmem>>, vector<1x16x16x128xbf16>
      %26 = vector.shape_cast %25 : vector<1x16x16x128xbf16> to vector<16x16x128xbf16>
      %27 = vector.shape_cast %24 : vector<16x16x128xbf16> to vector<1x16x16x128xbf16>
      tpu.vector_store %arg7[%c0_19, %c0_20, %c0_21, %c0_22], %27 {strides = array<i32>} : memref<1x16x16x128xbf16, #tpu.memory_space<vmem>>, vector<1x16x16x128xbf16>,
    } else {
    }
    return
  }
  func.func @transform_0(%arg0: i32, %arg1: i32, %arg2: i32) -> (i32, i32, i32, i32) {
    %c0_i32 = arith.constant 0 : i32
    %c0_i32_0 = arith.constant 0 : i32
    return %arg0, %arg1, %c0_i32, %arg2 : i32, i32, i32, i32
  }
  func.func @transform_1(%arg0: i32, %arg1: i32, %arg2: i32) -> (i32, i32) {
    %c0_i32 = arith.constant 0 : i32
    %c0_i32_0 = arith.constant 0 : i32
    return %arg2, %c0_i32 : i32, i32
  }
  func.func @transform_2(%arg0: i32, %arg1: i32, %arg2: i32) -> (i32, i32) {
    %c0_i32 = arith.constant 0 : i32
    %c0_i32_0 = arith.constant 0 : i32
    %c0_i32_1 = arith.constant 0 : i32
    return %c0_i32, %c0_i32_0 : i32, i32
  }
  func.func @transform_3(%arg0: i32, %arg1: i32, %arg2: i32) -> (i32, i32) {
    %c0_i32 = arith.constant 0 : i32
    %c0_i32_0 = arith.constant 0 : i32
    %c0_i32_1 = arith.constant 0 : i32
    return %c0_i32, %c0_i32_0 : i32, i32
  }
  func.func @transform_4(%arg0: i32, %arg1: i32, %arg2: i32) -> (i32, i32, i32, i32) {
    %c0_i32 = arith.constant 0 : i32
    %c0_i32_0 = arith.constant 0 : i32
    %c0_i32_1 = arith.constant 0 : i32
    return %arg0, %arg1, %c0_i32, %c0_i32_0 : i32, i32, i32, i32
  }
}

</mosaic_0001>

<llo_original>
// kernel: conv2d_module_forward.1
$region0: #{conv2d_module_forward.1}
  #allocation0 [shape = 'u32[]', space=smem, size = 0x4, offset = 0x4, fixed_abs, tag = 'smem constant byte address 0x4 - core index']
  #allocation1 [shape = 'u32[144,128]{1,0:T(1,128)}', space=vmem, size = 0x12000, scoped, tag = 'internal scratch']
  #allocation2 [shape = 'f32[256,128]{1,0:T(8,128)}', space=vmem, size = 0x20000, scoped, tag = 'scratch operand']
  %s0 = inlined_call_operand.vmem [shape: bf16[2,16,16,128], index: 0, kind: input, shape index: {}]
  %s1 = inlined_call_operand.vmem [shape: bf16[128,128], index: 1, kind: input, shape index: {}]
  %s2 = inlined_call_operand.vmem [shape: f32[1,128], index: 2, kind: input, shape index: {}]
  %s3 = inlined_call_operand.vmem [shape: f32[1,128], index: 3, kind: input, shape index: {}]
  %s4 = inlined_call_operand.vmem [shape: bf16[2,16,16,128], index: 4, kind: output, shape index: {}]
  %s5 = sld [smem:[#allocation0]]
  $region57: #{conv2d_module_forward.1} parent=0
    _
  %s7 = ssub.s32 1, %s5
  %s8 = scalar_select 0, %s7, %s5
  loop: start=0, step=1, limit=4
  $region2: #{conv2d_module_forward.1} parent=0 // loop_pre_header
    _
  $region3: #{conv2d_module_forward.1} parent=0 // loop_header
    %s10 = sphi 0, %s14
    %p11 = scmp.ge.s32.totalorder %s10, 4
    %s17 = sphi 0, %s36
    %s18 = sphi 0, %s32
    %s19 = sphi 0, %s28
    %s20 = sphi 0, %s17
    %s21 = sphi 0, %s18
    %s22 = sphi 0, %s19
    %s23 = sphi 0, %s20
    %s24 = sphi 0, %s21
    %s25 = sphi 0, %s22
    %s43 = sphi 0, %s45
    %s46 = sphi 0, %s43
    %s47 = sphi 0, %s46
    %s63 = sphi 0, %s47
    %s69 = sphi 0, %s71
    %s72 = sphi 0, %s69
    %s73 = sphi 0, %s72
    %s89 = sphi 0, %s73
    %s93 = sphi 0, %s93
    %s95 = sphi 0, %s93
    %s96 = sphi 0, %s95
    %s110 = sphi 0, %s96
    %s114 = sphi 0, %s114
    %s116 = sphi 0, %s114
    %s117 = sphi 0, %s116
    %s131 = sphi 0, %s117
    %s139 = sphi 0, %s141
    %s142 = sphi 0, %s139
    %s143 = sphi 0, %s142
    %s159 = sphi 0, %s143
  $region4: #{conv2d_module_forward.1} parent=0 // loop_header_branch
    %13 = sbr.rel (%p11) target = $region8
  $region5: #{conv2d_module_forward.1} parent=0 // loop_body
    %s15 = ssub.s32 %s10, 1
    %s16 = ssub.s32 %s10, 2
    %s26 = sadd.s32 1, %s19
    %p27 = scmp.ge.s32.totalorder %s26, 1
    %s28 = scalar_select %p27, 0, %s26
    %s29 = sadd.s32 1, %s18
    %s30 = scalar_select %p27, %s29, %s18
    %p31 = scmp.ge.s32.totalorder %s30, 1
    %s32 = scalar_select %p31, 0, %s30
    %s33 = sadd.s32 1, %s17
    %s34 = scalar_select %p31, %s33, %s17
    %p35 = scmp.ge.s32.totalorder %s34, 2
    %s36 = scalar_select %p35, 0, %s34
    %s37 = ssub.s32 %s17, %s36
    %s38 = ssub.s32 %s18, %s32
    %s39 = sor.u32 %s37, %s38
    %s40 = ssub.s32 %s19, %s28
    %s41 = sor.u32 %s39, %s40
    %p42 = scmp.eq.s32.totalorder %s41, 0
    %s44 = sadd.s32 %s43, 1
    %s45 = scalar_select %p42, %s43, %s44
    %p48 = pneg %p42
    %p49 = scmp.eq.s32.totalorder %s10, 1
    %p50 = por %p48, %p49
    %p51 = scmp.ne.s32.totalorder %s43, %s46
    %p52 = scmp.eq.s32.totalorder %s10, 0
    %p53 = por %p51, %p52
    %p54 = scmp.ne.s32.totalorder %s43, %s46
    %p55 = scmp.eq.s32.totalorder %s15, 1
    %p56 = por %p54, %p55
    %p57 = scmp.ne.s32.totalorder %s46, %s47
    %p58 = scmp.eq.s32.totalorder %s15, 0
    %p59 = por %p57, %p58
    %p60 = scmp.ne.s32.totalorder %s46, %s47
    %p61 = scmp.eq.s32.totalorder %s16, 1
    %p62 = por %p60, %p61
    %p64 = scmp.ne.s32.totalorder %s47, %s63
    %p65 = scmp.eq.s32.totalorder %s16, 0
    %p66 = por %p64, %p65
    %s67 = ssub.s32 %s19, %s28
    %p68 = scmp.eq.s32.totalorder %s67, 0
    %s70 = sadd.s32 %s69, 1
    %s71 = scalar_select %p68, %s69, %s70
    %p74 = pneg %p68
    %p75 = scmp.eq.s32.totalorder %s10, 1
    %p76 = por %p74, %p75
    %p77 = scmp.ne.s32.totalorder %s69, %s72
    %p78 = scmp.eq.s32.totalorder %s10, 0
    %p79 = por %p77, %p78
    %p80 = scmp.ne.s32.totalorder %s69, %s72
    %p81 = scmp.eq.s32.totalorder %s15, 1
    %p82 = por %p80, %p81
    %p83 = scmp.ne.s32.totalorder %s72, %s73
    %p84 = scmp.eq.s32.totalorder %s15, 0
    %p85 = por %p83, %p84
    %p86 = scmp.ne.s32.totalorder %s72, %s73
    %p87 = scmp.eq.s32.totalorder %s16, 1
    %p88 = por %p86, %p87
    %p90 = scmp.ne.s32.totalorder %s73, %s89
    %p91 = scmp.eq.s32.totalorder %s16, 0
    %p92 = por %p90, %p91
    %s94 = sadd.s32 %s93, 1
    %p97 = scmp.eq.s32.totalorder %s10, 1
    %p98 = scmp.ne.s32.totalorder %s93, %s95
    %p99 = scmp.eq.s32.totalorder %s10, 0
    %p100 = por %p98, %p99
    %p101 = scmp.ne.s32.totalorder %s93, %s95
    %p102 = scmp.eq.s32.totalorder %s15, 1
    %p103 = por %p101, %p102
    %p104 = scmp.ne.s32.totalorder %s95, %s96
    %p105 = scmp.eq.s32.totalorder %s15, 0
    %p106 = por %p104, %p105
    %p107 = scmp.ne.s32.totalorder %s95, %s96
    %p108 = scmp.eq.s32.totalorder %s16, 1
    %p109 = por %p107, %p108
    %p111 = scmp.ne.s32.totalorder %s96, %s110
    %p112 = scmp.eq.s32.totalorder %s16, 0
    %p113 = por %p111, %p112
    %s115 = sadd.s32 %s114, 1
    %p118 = scmp.eq.s32.totalorder %s10, 1
    %p119 = scmp.ne.s32.totalorder %s114, %s116
    %p120 = scmp.eq.s32.totalorder %s10, 0
    %p121 = por %p119, %p120
    %p122 = scmp.ne.s32.totalorder %s114, %s116
    %p123 = scmp.eq.s32.totalorder %s15, 1
    %p124 = por %p122, %p123
    %p125 = scmp.ne.s32.totalorder %s116, %s117
    %p126 = scmp.eq.s32.totalorder %s15, 0
    %p127 = por %p125, %p126
    %p128 = scmp.ne.s32.totalorder %s116, %s117
    %p129 = scmp.eq.s32.totalorder %s16, 1
    %p130 = por %p128, %p129
    %p132 = scmp.ne.s32.totalorder %s117, %s131
    %p133 = scmp.eq.s32.totalorder %s16, 0
    %p134 = por %p132, %p133
    %s135 = ssub.s32 %s17, %s36
    %s136 = ssub.s32 %s18, %s32
    %s137 = sor.u32 %s135, %s136
    %p138 = scmp.eq.s32.totalorder %s137, 0
    %s140 = sadd.s32 %s139, 1
    %s141 = scalar_select %p138, %s139, %s140
    %p144 = pneg %p138
    %p145 = scmp.eq.s32.totalorder %s10, 1
    %p146 = por %p144, %p145
    %p147 = scmp.ne.s32.totalorder %s139, %s142
    %p148 = scmp.eq.s32.totalorder %s10, 0
    %p149 = por %p147, %p148
    %p150 = scmp.ne.s32.totalorder %s139, %s142
    %p151 = scmp.eq.s32.totalorder %s15, 1
    %p152 = por %p150, %p151
    %p153 = scmp.ne.s32.totalorder %s142, %s143
    %p154 = scmp.eq.s32.totalorder %s15, 0
    %p155 = por %p153, %p154
    %p156 = scmp.ne.s32.totalorder %s142, %s143
    %p157 = scmp.eq.s32.totalorder %s16, 1
    %p158 = por %p156, %p157
    %p160 = scmp.ne.s32.totalorder %s143, %s159
    %p161 = scmp.eq.s32.totalorder %s16, 0
    %p162 = por %p160, %p161
    %p163 = scmp.le.s32.totalorder 1, %s10
    %p164 = scmp.lt.s32.totalorder %s10, 3
    %p165 = pnand %p163, %p164
    %p166 = pneg %p165
    // Predicated region
    $region9: #{conv2d_module_forward.1} parent=5 // pred_check
      _
    $region10: #{conv2d_module_forward.1} parent=5 // pred_check_branch
      %168 = sbr.rel (%p165) target = $region12
    $region11: #{conv2d_module_forward.1} parent=5 // pred_region
      %s169 = ssub.s32 %s10, 1
      // Predicated region
      $region13: #{conv2d_module_forward.1} parent=11 // pred_check
        %p170 = pneg %p85
      $region14: #{conv2d_module_forward.1} parent=11 // pred_check_branch
        %172 = sbr.rel (%p170) target = $region16
      $region15: #{conv2d_module_forward.1} parent=11 // pred_region
        %s173 = smul.u32 16, %s22
        %p174 = scmp.lt.s32.totalorder %s173, 15
        %s175 = scalar_select %p174, %s173, 15
        %s176 = smul.addr %s175, 4
        %s177 = scalar_lea.vmem %s1, %s176
        %s178 = smul.u32 16, %s22
      $region16: #{conv2d_module_forward.1} parent=11 // pred_fallthru
        _
      // Predicated region
      $region17: #{conv2d_module_forward.1} parent=11 // pred_check
        %p179 = pneg %p106
      $region18: #{conv2d_module_forward.1} parent=11 // pred_check_branch
        %181 = sbr.rel (%p179) target = $region20
      $region19: #{conv2d_module_forward.1} parent=11 // pred_region
        _
      $region20: #{conv2d_module_forward.1} parent=11 // pred_fallthru
        _
      // Predicated region
      $region21: #{conv2d_module_forward.1} parent=11 // pred_check
        %p182 = pneg %p127
      $region22: #{conv2d_module_forward.1} parent=11 // pred_check_branch
        %184 = sbr.rel (%p182) target = $region24
      $region23: #{conv2d_module_forward.1} parent=11 // pred_region
        _
      $region24: #{conv2d_module_forward.1} parent=11 // pred_fallthru
        _
    $region12: #{conv2d_module_forward.1} parent=5 // pred_fallthru
      _
    %p185 = scmp.lt.s32.totalorder %s10, 2
    // Predicated region
    $region25: #{conv2d_module_forward.1} parent=5 // pred_check
      %p186 = pneg %p185
    $region26: #{conv2d_module_forward.1} parent=5 // pred_check_branch
      %188 = sbr.rel (%p186) target = $region28
    $region27: #{conv2d_module_forward.1} parent=5 // pred_region
      // Predicated region
      $region29: #{conv2d_module_forward.1} parent=27 // pred_check
        %p189 = pneg %p53
      $region30: #{conv2d_module_forward.1} parent=27 // pred_check_branch
        %191 = sbr.rel (%p189) target = $region32
      $region31: #{conv2d_module_forward.1} parent=27 // pred_region
        %s192 = smul.u32 16, %s18
        %p193 = scmp.lt.s32.totalorder %s17, 1
        %s194 = scalar_select %p193, %s17, 1
        %p195 = scmp.lt.s32.totalorder %s192, 15
        %s196 = scalar_select %p195, %s192, 15
        %p197 = scmp.lt.s32.totalorder %s19, 0
        %s198 = scalar_select %p197, %s19, 0
        %s199 = smul.addr %s196, 2
        %s200 = sadd.s32 %s198, %s199
        %s201 = smul.addr %s194, 32
        %s202 = sadd.s32 %s200, %s201
        %s203 = smul.addr %s202, 4
        %s204 = scalar_lea.vmem %s0, %s203
        %s205 = smul.u32 16, %s18
      $region32: #{conv2d_module_forward.1} parent=27 // pred_fallthru
        _
    $region28: #{conv2d_module_forward.1} parent=5 // pred_fallthru
      _
    %p206 = scmp.le.s32.totalorder 1, %s10
    %p207 = scmp.lt.s32.totalorder %s10, 3
    %p208 = pnand %p206, %p207
    %p209 = pneg %p208
    // Predicated region
    $region33: #{conv2d_module_forward.1} parent=5 // pred_check
      _
    $region34: #{conv2d_module_forward.1} parent=5 // pred_check_branch
      %211 = sbr.rel (%p208) target = $region36
    $region35: #{conv2d_module_forward.1} parent=5 // pred_region
      %s212 = ssub.s32 %s10, 1
      %s213 = smul.u32 16, %s21
      %p214 = scmp.lt.s32.totalorder %s20, 1
      %s215 = scalar_select %p214, %s20, 1
      %p216 = scmp.lt.s32.totalorder %s213, 15
      %s217 = scalar_select %p216, %s213, 15
      %p218 = scmp.lt.s32.totalorder %s22, 0
      %s219 = scalar_select %p218, %s22, 0
      %s220 = smul.addr %s217, 2
      %s221 = sadd.s32 %s219, %s220
      %s222 = smul.addr %s215, 32
      %s223 = sadd.s32 %s221, %s222
      %s224 = smul.addr %s223, 4
      %s225 = scalar_lea.vmem %s0, %s224
      %p226 = pneg %p59
      %p227 = pneg %p56
      %s228 = smul.u32 16, %s22
      %p229 = scmp.lt.s32.totalorder %s228, 15
      %s230 = scalar_select %p229, %s228, 15
      %s231 = smul.addr %s230, 4
      %s232 = scalar_lea.vmem %s1, %s231
      %p233 = pneg %p85
      %p234 = pneg %p82
      %p235 = pneg %p106
      %p236 = pneg %p103
      %p237 = pneg %p127
      %p238 = pneg %p124
      %p239 = pneg %p155
      %p240 = pneg %p152
      %s241 = smul.u32 16, %s21
      %p242 = scmp.lt.s32.totalorder %s20, 1
      %s243 = scalar_select %p242, %s20, 1
      %p244 = scmp.lt.s32.totalorder %s241, 15
      %s245 = scalar_select %p244, %s241, 15
      %s246 = smul.addr %s245, 2
      %s247 = smul.addr %s243, 32
      %s248 = sadd.s32 %s246, %s247
      %s249 = smul.addr %s248, 4
      %s250 = scalar_lea.vmem %s4, %s249
      %s251 = smul.u32 16, %s21
      %p252 = scmp.lt.s32.totalorder %s20, 1
      %s253 = scalar_select %p252, %s20, 1
      %p254 = scmp.lt.s32.totalorder %s251, 15
      %s255 = scalar_select %p254, %s251, 15
      %p256 = scmp.lt.s32.totalorder %s22, 0
      %s257 = scalar_select %p256, %s22, 0
      %s258 = smul.addr %s255, 2
      %s259 = sadd.s32 %s257, %s258
      %s260 = smul.addr %s253, 32
      %s261 = sadd.s32 %s259, %s260
      %s262 = smul.addr %s261, 4
      %s263 = scalar_lea.vmem %s0, %s262
      %s264 = smul.u32 16, %s21
      %s265 = smul.u32 16, %s22
      %p266 = scmp.lt.s32.totalorder %s265, 15
      %s267 = scalar_select %p266, %s265, 15
      %s268 = smul.addr %s267, 4
      %s269 = scalar_lea.vmem %s1, %s268
      %s270 = smul.u32 16, %s22
      %s271 = smul.u32 16, %s21
      %p272 = scmp.lt.s32.totalorder %s20, 1
      %s273 = scalar_select %p272, %s20, 1
      %p274 = scmp.lt.s32.totalorder %s271, 15
      %s275 = scalar_select %p274, %s271, 15
      %s276 = smul.addr %s275, 2
      %s277 = smul.addr %s273, 32
      %s278 = sadd.s32 %s276, %s277
      %s279 = smul.addr %s278, 4
      %s280 = scalar_lea.vmem %s4, %s279
      %s281 = smul.u32 16, %s21
      %p283 = scmp.eq.s32.totalorder %s22, 0
      // Predicated region
      $region37: #{conv2d_module_forward.1} parent=35 // pred_check
        %p284 = pneg %p283
      $region38: #{conv2d_module_forward.1} parent=35 // pred_check_branch
        %286 = sbr.rel (%p284) target = $region40
      $region39: #{conv2d_module_forward.1} parent=35 // pred_region
        %287 = vst [vmem:[#allocation2] sm:$0xff] 0.0
        %288 = vst [vmem:[#allocation2 + $0x8] sm:$0xff] 0.0
        %289 = vst [vmem:[#allocation2 + $0x10] sm:$0xff] 0.0
        %290 = vst [vmem:[#allocation2 + $0x18] sm:$0xff] 0.0
        %291 = vst [vmem:[#allocation2 + $0x20] sm:$0xff] 0.0
        %292 = vst [vmem:[#allocation2 + $0x28] sm:$0xff] 0.0
        %293 = vst [vmem:[#allocation2 + $0x30] sm:$0xff] 0.0
        %294 = vst [vmem:[#allocation2 + $0x38] sm:$0xff] 0.0
        %295 = vst [vmem:[#allocation2 + $0x40] sm:$0xff] 0.0
        %296 = vst [vmem:[#allocation2 + $0x48] sm:$0xff] 0.0
        %297 = vst [vmem:[#allocation2 + $0x50] sm:$0xff] 0.0
        %298 = vst [vmem:[#allocation2 + $0x58] sm:$0xff] 0.0
        %299 = vst [vmem:[#allocation2 + $0x60] sm:$0xff] 0.0
        %300 = vst [vmem:[#allocation2 + $0x68] sm:$0xff] 0.0
        %301 = vst [vmem:[#allocation2 + $0x70] sm:$0xff] 0.0
        %302 = vst [vmem:[#allocation2 + $0x78] sm:$0xff] 0.0
        %303 = vst [vmem:[#allocation2 + $0x80] sm:$0xff] 0.0
        %304 = vst [vmem:[#allocation2 + $0x88] sm:$0xff] 0.0
        %305 = vst [vmem:[#allocation2 + $0x90] sm:$0xff] 0.0
        %306 = vst [vmem:[#allocation2 + $0x98] sm:$0xff] 0.0
        %307 = vst [vmem:[#allocation2 + $0xa0] sm:$0xff] 0.0
        %308 = vst [vmem:[#allocation2 + $0xa8] sm:$0xff] 0.0
        %309 = vst [vmem:[#allocation2 + $0xb0] sm:$0xff] 0.0
        %310 = vst [vmem:[#allocation2 + $0xb8] sm:$0xff] 0.0
        %311 = vst [vmem:[#allocation2 + $0xc0] sm:$0xff] 0.0
        %312 = vst [vmem:[#allocation2 + $0xc8] sm:$0xff] 0.0
        %313 = vst [vmem:[#allocation2 + $0xd0] sm:$0xff] 0.0
        %314 = vst [vmem:[#allocation2 + $0xd8] sm:$0xff] 0.0
        %315 = vst [vmem:[#allocation2 + $0xe0] sm:$0xff] 0.0
        %316 = vst [vmem:[#allocation2 + $0xe8] sm:$0xff] 0.0
        %317 = vst [vmem:[#allocation2 + $0xf0] sm:$0xff] 0.0
        %318 = vst [vmem:[#allocation2 + $0xf8] sm:$0xff] 0.0
      $region40: #{conv2d_module_forward.1} parent=35 // pred_fallthru
        _
      %v319 = vld [vmem:[%s263] sm:$0xf]
      %v320 = vld [vmem:[%s263 + $0x4] sm:$0xf]
      %v321 = vld [vmem:[%s263 + $0x8] sm:$0xf]
      %v322 = vld [vmem:[%s263 + $0xc] sm:$0xf]
      %v323 = vld [vmem:[%s263 + $0x10] sm:$0xf]
      %v324 = vld [vmem:[%s263 + $0x14] sm:$0xf]
      %v325 = vld [vmem:[%s263 + $0x18] sm:$0xf]
      %v326 = vld [vmem:[%s263 + $0x1c] sm:$0xf]
      %v327 = vld [vmem:[%s263 + $0x20] sm:$0xf]
      %v328 = vld [vmem:[%s263 + $0x24] sm:$0xf]
      %v329 = vld [vmem:[%s263 + $0x28] sm:$0xf]
      %v330 = vld [vmem:[%s263 + $0x2c] sm:$0xf]
      %v331 = vld [vmem:[%s263 + $0x30] sm:$0xf]
      %v332 = vld [vmem:[%s263 + $0x34] sm:$0xf]
      %v333 = vld [vmem:[%s263 + $0x38] sm:$0xf]
      %v334 = vld [vmem:[%s263 + $0x3c] sm:$0xf]
      %v335 = vld [vmem:[%s263 + $0x40] sm:$0xf]
      %v336 = vld [vmem:[%s263 + $0x44] sm:$0xf]
      %v337 = vld [vmem:[%s263 + $0x48] sm:$0xf]
      %v338 = vld [vmem:[%s263 + $0x4c] sm:$0xf]
      %v339 = vld [vmem:[%s263 + $0x50] sm:$0xf]
      %v340 = vld [vmem:[%s263 + $0x54] sm:$0xf]
      %v341 = vld [vmem:[%s263 + $0x58] sm:$0xf]
      %v342 = vld [vmem:[%s263 + $0x5c] sm:$0xf]
      %v343 = vld [vmem:[%s263 + $0x60] sm:$0xf]
      %v344 = vld [vmem:[%s263 + $0x64] sm:$0xf]
      %v345 = vld [vmem:[%s263 + $0x68] sm:$0xf]
      %v346 = vld [vmem:[%s263 + $0x6c] sm:$0xf]
      %v347 = vld [vmem:[%s263 + $0x70] sm:$0xf]
      %v348 = vld [vmem:[%s263 + $0x74] sm:$0xf]
      %v349 = vld [vmem:[%s263 + $0x78] sm:$0xf]
      %v350 = vld [vmem:[%s263 + $0x7c] sm:$0xf]
      %v351 = vld [vmem:[#allocation2] sm:$0xff]
      %v352 = vld [vmem:[#allocation2 + $0x8] sm:$0xff]
      %v353 = vld [vmem:[#allocation2 + $0x10] sm:$0xff]
      %v354 = vld [vmem:[#allocation2 + $0x18] sm:$0xff]
      %v355 = vld [vmem:[#allocation2 + $0x20] sm:$0xff]
      %v356 = vld [vmem:[#allocation2 + $0x28] sm:$0xff]
      %v357 = vld [vmem:[#allocation2 + $0x30] sm:$0xff]
      %v358 = vld [vmem:[#allocation2 + $0x38] sm:$0xff]
      %v359 = vld [vmem:[#allocation2 + $0x40] sm:$0xff]
      %v360 = vld [vmem:[#allocation2 + $0x48] sm:$0xff]
      %v361 = vld [vmem:[#allocation2 + $0x50] sm:$0xff]
      %v362 = vld [vmem:[#allocation2 + $0x58] sm:$0xff]
      %v363 = vld [vmem:[#allocation2 + $0x60] sm:$0xff]
      %v364 = vld [vmem:[#allocation2 + $0x68] sm:$0xff]
      %v365 = vld [vmem:[#allocation2 + $0x70] sm:$0xff]
      %v366 = vld [vmem:[#allocation2 + $0x78] sm:$0xff]
      %v367 = vld [vmem:[#allocation2 + $0x80] sm:$0xff]
      %v368 = vld [vmem:[#allocation2 + $0x88] sm:$0xff]
      %v369 = vld [vmem:[#allocation2 + $0x90] sm:$0xff]
      %v370 = vld [vmem:[#allocation2 + $0x98] sm:$0xff]
      %v371 = vld [vmem:[#allocation2 + $0xa0] sm:$0xff]
      %v372 = vld [vmem:[#allocation2 + $0xa8] sm:$0xff]
      %v373 = vld [vmem:[#allocation2 + $0xb0] sm:$0xff]
      %v374 = vld [vmem:[#allocation2 + $0xb8] sm:$0xff]
      %v375 = vld [vmem:[#allocation2 + $0xc0] sm:$0xff]
      %v376 = vld [vmem:[#allocation2 + $0xc8] sm:$0xff]
      %v377 = vld [vmem:[#allocation2 + $0xd0] sm:$0xff]
      %v378 = vld [vmem:[#allocation2 + $0xd8] sm:$0xff]
      %v379 = vld [vmem:[#allocation2 + $0xe0] sm:$0xff]
      %v380 = vld [vmem:[#allocation2 + $0xe8] sm:$0xff]
      %v381 = vld [vmem:[#allocation2 + $0xf0] sm:$0xff]
      %v382 = vld [vmem:[#allocation2 + $0xf8] sm:$0xff]
      %v383 = vld [vmem:[%s269] sm:$0xf]
      %v384 = vld [vmem:[%s269 + $0x4] sm:$0xf]
      %v385 = vld [vmem:[%s269 + $0x8] sm:$0xf]
      %v386 = vld [vmem:[%s269 + $0xc] sm:$0xf]
      %v387 = vld [vmem:[%s269 + $0x10] sm:$0xf]
      %v388 = vld [vmem:[%s269 + $0x14] sm:$0xf]
      %v389 = vld [vmem:[%s269 + $0x18] sm:$0xf]
      %v390 = vld [vmem:[%s269 + $0x1c] sm:$0xf]
      %v391 = vld [vmem:[%s269 + $0x20] sm:$0xf]
      %v392 = vld [vmem:[%s269 + $0x24] sm:$0xf]
      %v393 = vld [vmem:[%s269 + $0x28] sm:$0xf]
      %v394 = vld [vmem:[%s269 + $0x2c] sm:$0xf]
      %v395 = vld [vmem:[%s269 + $0x30] sm:$0xf]
      %v396 = vld [vmem:[%s269 + $0x34] sm:$0xf]
      %v397 = vld [vmem:[%s269 + $0x38] sm:$0xf]
      %v398 = vld [vmem:[%s269 + $0x3c] sm:$0xf]
      %v431 = vunpack.c.l.b16 %v319
      %v432 = vunpack.c.l.b16 %v320
      %v433 = vunpack.c.l.b16 %v321
      %v434 = vunpack.c.l.b16 %v322
      %v435 = vunpack.c.l.b16 %v323
      %v436 = vunpack.c.l.b16 %v324
      %v437 = vunpack.c.l.b16 %v325
      %v438 = vunpack.c.l.b16 %v326
      %v439 = vunpack.c.l.b16 %v327
      %v440 = vunpack.c.l.b16 %v328
      %v441 = vunpack.c.l.b16 %v329
      %v442 = vunpack.c.l.b16 %v330
      %v443 = vunpack.c.l.b16 %v331
      %v444 = vunpack.c.l.b16 %v332
      %v445 = vunpack.c.l.b16 %v333
      %v446 = vunpack.c.l.b16 %v334
      %v447 = vunpack.c.l.b16 %v335
      %v448 = vunpack.c.l.b16 %v336
      %v449 = vunpack.c.l.b16 %v337
      %v450 = vunpack.c.l.b16 %v338
      %v451 = vunpack.c.l.b16 %v339
      %v452 = vunpack.c.l.b16 %v340
      %v453 = vunpack.c.l.b16 %v341
      %v454 = vunpack.c.l.b16 %v342
      %v455 = vunpack.c.l.b16 %v343
      %v456 = vunpack.c.l.b16 %v344
      %v457 = vunpack.c.l.b16 %v345
      %v458 = vunpack.c.l.b16 %v346
      %v459 = vunpack.c.l.b16 %v347
      %v460 = vunpack.c.l.b16 %v348
      %v461 = vunpack.c.l.b16 %v349
      %v462 = vunpack.c.l.b16 %v350
      %v463 = vpack.c.b16 %v432, %v431
      %v464 = vpack.c.b16 %v434, %v433
      %v465 = vpack.c.b16 %v436, %v435
      %v466 = vpack.c.b16 %v438, %v437
      %v467 = vpack.c.b16 %v440, %v439
      %v468 = vpack.c.b16 %v442, %v441
      %v469 = vpack.c.b16 %v444, %v443
      %v470 = vpack.c.b16 %v446, %v445
      %v471 = vpack.c.b16 %v448, %v447
      %v472 = vpack.c.b16 %v450, %v449
      %v473 = vpack.c.b16 %v452, %v451
      %v474 = vpack.c.b16 %v454, %v453
      %v475 = vpack.c.b16 %v456, %v455
      %v476 = vpack.c.b16 %v458, %v457
      %v477 = vpack.c.b16 %v460, %v459
      %v478 = vpack.c.b16 %v462, %v461
      %v511 = vunpack.c.l.b16 %v383
      %v512 = vunpack.c.l.b16 %v384
      %v513 = vunpack.c.l.b16 %v385
      %v514 = vunpack.c.l.b16 %v386
      %v515 = vunpack.c.l.b16 %v387
      %v516 = vunpack.c.l.b16 %v388
      %v517 = vunpack.c.l.b16 %v389
      %v518 = vunpack.c.l.b16 %v390
      %v519 = vunpack.c.l.b16 %v391
      %v520 = vunpack.c.l.b16 %v392
      %v521 = vunpack.c.l.b16 %v393
      %v522 = vunpack.c.l.b16 %v394
      %v523 = vunpack.c.l.b16 %v395
      %v524 = vunpack.c.l.b16 %v396
      %v525 = vunpack.c.l.b16 %v397
      %v526 = vunpack.c.l.b16 %v398
      %v527 = vpack.c.b16 %v512, %v511
      %v528 = vpack.c.b16 %v514, %v513
      %v529 = vpack.c.b16 %v516, %v515
      %v530 = vpack.c.b16 %v518, %v517
      %v531 = vpack.c.b16 %v520, %v519
      %v532 = vpack.c.b16 %v522, %v521
      %v533 = vpack.c.b16 %v524, %v523
      %v534 = vpack.c.b16 %v526, %v525
      %543 = vmatprep.subr.bf16.mxu0 0
      %544 = vmatpush1.bf16.msra.mxu0 %v527
      %545 = vmatprep.subr.bf16.mxu0 0
      %546 = vmatpush1.bf16.msra.mxu0 %v528
      %547 = vmatprep.subr.bf16.mxu0 0
      %548 = vmatpush1.bf16.msra.mxu0 %v529
      %549 = vmatprep.subr.bf16.mxu0 0
      %550 = vmatpush1.bf16.msra.mxu0 %v530
      %551 = vmatprep.subr.bf16.mxu0 0
      %552 = vmatpush1.bf16.msra.mxu0 %v531
      %553 = vmatprep.subr.bf16.mxu0 0
      %554 = vmatpush1.bf16.msra.mxu0 %v532
      %555 = vmatprep.subr.bf16.mxu0 0
      %556 = vmatpush1.bf16.msra.mxu0 %v533
      %557 = vmatprep.subr.bf16.mxu0 0
      %558 = vmatpush1.bf16.msra.mxu0 %v534
      %559 = vmatprep.subr.bf16.mxu0 0
      %560 = vmatpush1.bf16.msra.mxu0 0
      %561 = vmatprep.subr.bf16.mxu0 0
      %562 = vmatpush1.bf16.msra.mxu0 0
      %563 = vmatprep.subr.bf16.mxu0 0
      %564 = vmatpush1.bf16.msra.mxu0 0
      %565 = vmatprep.subr.bf16.mxu0 0
      %566 = vmatpush1.bf16.msra.mxu0 0
      %567 = vmatprep.subr.bf16.mxu0 0
      %568 = vmatpush1.bf16.msra.mxu0 0
      %569 = vmatprep.subr.bf16.mxu0 0
      %570 = vmatpush1.bf16.msra.mxu0 0
      %571 = vmatprep.subr.bf16.mxu0 0
      %572 = vmatpush1.bf16.msra.mxu0 0
      %573 = vmatprep.subr.bf16.mxu0 0
      %574 = vmatpush1.bf16.msra.mxu0 0
      %575 = vmatprep.mubr.bf16.mxu0 0
      %576 = vmatmul.mubr.bf16.gmra.mrb[0].mxu0 %v463
      %v577 = vpop.f32.mrb[0].mxu0
      %v578 = vadd.f32 0.0, %v577
      %v579 = vpop.f32.mrb[0].mxu0
      %v580 = vpop.f32.mrb[0].mxu0
      %v581 = vadd.f32 0.0, %v580
      %v582 = vpop.f32.mrb[0].mxu0
      %583 = vmatprep.mubr.bf16.mxu0 0
      %584 = vmatmul.mubr.bf16.gmra.mrb[0].mxu0 %v464
      %v585 = vpop.f32.mrb[0].mxu0
      %v586 = vadd.f32 0.0, %v585
      %v587 = vpop.f32.mrb[0].mxu0
      %v588 = vpop.f32.mrb[0].mxu0
      %v589 = vadd.f32 0.0, %v588
      %v590 = vpop.f32.mrb[0].mxu0
      %591 = vmatprep.mubr.bf16.mxu0 0
      %592 = vmatmul.mubr.bf16.gmra.mrb[0].mxu0 %v465
      %v593 = vpop.f32.mrb[0].mxu0
      %v594 = vadd.f32 0.0, %v593
      %v595 = vpop.f32.mrb[0].mxu0
      %v596 = vpop.f32.mrb[0].mxu0
      %v597 = vadd.f32 0.0, %v596
      %v598 = vpop.f32.mrb[0].mxu0
      %599 = vmatprep.mubr.bf16.mxu0 0
      %600 = vmatmul.mubr.bf16.gmra.mrb[0].mxu0 %v466
      %v601 = vpop.f32.mrb[0].mxu0
      %v602 = vadd.f32 0.0, %v601
      %v603 = vpop.f32.mrb[0].mxu0
      %v604 = vpop.f32.mrb[0].mxu0
      %v605 = vadd.f32 0.0, %v604
      %v606 = vpop.f32.mrb[0].mxu0
      %607 = vmatprep.mubr.bf16.mxu0 0
      %608 = vmatmul.mubr.bf16.gmra.mrb[0].mxu0 %v467
      %v609 = vpop.f32.mrb[0].mxu0
      %v610 = vadd.f32 0.0, %v609
      %v611 = vpop.f32.mrb[0].mxu0
      %v612 = vpop.f32.mrb[0].mxu0
      %v613 = vadd.f32 0.0, %v612
      %v614 = vpop.f32.mrb[0].mxu0
      %615 = vmatprep.mubr.bf16.mxu0 0
      %616 = vmatmul.mubr.bf16.gmra.mrb[0].mxu0 %v468
      %v617 = vpop.f32.mrb[0].mxu0
      %v618 = vadd.f32 0.0, %v617
      %v619 = vpop.f32.mrb[0].mxu0
      %v620 = vpop.f32.mrb[0].mxu0
      %v621 = vadd.f32 0.0, %v620
      %v622 = vpop.f32.mrb[0].mxu0
      %623 = vmatprep.mubr.bf16.mxu0 0
      %624 = vmatmul.mubr.bf16.gmra.mrb[0].mxu0 %v469
      %v625 = vpop.f32.mrb[0].mxu0
      %v626 = vadd.f32 0.0, %v625
      %v627 = vpop.f32.mrb[0].mxu0
      %v628 = vpop.f32.mrb[0].mxu0
      %v629 = vadd.f32 0.0, %v628
      %v630 = vpop.f32.mrb[0].mxu0
      %631 = vmatprep.mubr.bf16.mxu0 0
      %632 = vmatmul.mubr.bf16.gmra.mrb[0].mxu0 %v470
      %v633 = vpop.f32.mrb[0].mxu0
      %v634 = vadd.f32 0.0, %v633
      %v635 = vpop.f32.mrb[0].mxu0
      %v636 = vpop.f32.mrb[0].mxu0
      %v637 = vadd.f32 0.0, %v636
      %v638 = vpop.f32.mrb[0].mxu0
      %639 = vmatprep.mubr.bf16.mxu0 0
      %640 = vmatmul.mubr.bf16.gmra.mrb[0].mxu0 %v471
      %v641 = vpop.f32.mrb[0].mxu0
      %v642 = vadd.f32 0.0, %v641
      %v643 = vpop.f32.mrb[0].mxu0
      %v644 = vpop.f32.mrb[0].mxu0
      %v645 = vadd.f32 0.0, %v644
      %v646 = vpop.f32.mrb[0].mxu0
      %647 = vmatprep.mubr.bf16.mxu0 0
      %648 = vmatmul.mubr.bf16.gmra.mrb[0].mxu0 %v472
      %v649 = vpop.f32.mrb[0].mxu0
      %v650 = vadd.f32 0.0, %v649
      %v651 = vpop.f32.mrb[0].mxu0
      %v652 = vpop.f32.mrb[0].mxu0
      %v653 = vadd.f32 0.0, %v652
      %v654 = vpop.f32.mrb[0].mxu0
      %655 = vmatprep.mubr.bf16.mxu0 0
      %656 = vmatmul.mubr.bf16.gmra.mrb[0].mxu0 %v473
      %v657 = vpop.f32.mrb[0].mxu0
      %v658 = vadd.f32 0.0, %v657
      %v659 = vpop.f32.mrb[0].mxu0
      %v660 = vpop.f32.mrb[0].mxu0
      %v661 = vadd.f32 0.0, %v660
      %v662 = vpop.f32.mrb[0].mxu0
      %663 = vmatprep.mubr.bf16.mxu0 0
      %664 = vmatmul.mubr.bf16.gmra.mrb[0].mxu0 %v474
      %v665 = vpop.f32.mrb[0].mxu0
      %v666 = vadd.f32 0.0, %v665
      %v667 = vpop.f32.mrb[0].mxu0
      %v668 = vpop.f32.mrb[0].mxu0
      %v669 = vadd.f32 0.0, %v668
      %v670 = vpop.f32.mrb[0].mxu0
      %671 = vmatprep.mubr.bf16.mxu0 0
      %672 = vmatmul.mubr.bf16.gmra.mrb[0].mxu0 %v475
      %v673 = vpop.f32.mrb[0].mxu0
      %v674 = vadd.f32 0.0, %v673
      %v675 = vpop.f32.mrb[0].mxu0
      %v676 = vpop.f32.mrb[0].mxu0
      %v677 = vadd.f32 0.0, %v676
      %v678 = vpop.f32.mrb[0].mxu0
      %679 = vmatprep.mubr.bf16.mxu0 0
      %680 = vmatmul.mubr.bf16.gmra.mrb[0].mxu0 %v476
      %v681 = vpop.f32.mrb[0].mxu0
      %v682 = vadd.f32 0.0, %v681
      %v683 = vpop.f32.mrb[0].mxu0
      %v684 = vpop.f32.mrb[0].mxu0
      %v685 = vadd.f32 0.0, %v684
      %v686 = vpop.f32.mrb[0].mxu0
      %687 = vmatprep.mubr.bf16.mxu0 0
      %688 = vmatmul.mubr.bf16.gmra.mrb[0].mxu0 %v477
      %v689 = vpop.f32.mrb[0].mxu0
      %v690 = vadd.f32 0.0, %v689
      %v691 = vpop.f32.mrb[0].mxu0
      %v692 = vpop.f32.mrb[0].mxu0
      %v693 = vadd.f32 0.0, %v692
      %v694 = vpop.f32.mrb[0].mxu0
      %695 = vmatprep.mubr.bf16.mxu0 0
      %696 = vmatmul.mubr.bf16.gmra.mrb[0].mxu0 %v478
      %v697 = vpop.f32.mrb[0].mxu0
      %v698 = vadd.f32 0.0, %v697
      %v699 = vpop.f32.mrb[0].mxu0
      %v700 = vpop.f32.mrb[0].mxu0
      %v701 = vadd.f32 0.0, %v700
      %v702 = vpop.f32.mrb[0].mxu0
      %703 = vdwg.mxu0
      %v704 = vadd.f32 %v351, %v578
      %v705 = vadd.f32 %v352, %v581
      %v706 = vadd.f32 %v353, %v586
      %v707 = vadd.f32 %v354, %v589
      %v708 = vadd.f32 %v355, %v594
      %v709 = vadd.f32 %v356, %v597
      %v710 = vadd.f32 %v357, %v602
      %v711 = vadd.f32 %v358, %v605
      %v712 = vadd.f32 %v359, %v610
      %v713 = vadd.f32 %v360, %v613
      %v714 = vadd.f32 %v361, %v618
      %v715 = vadd.f32 %v362, %v621
      %v716 = vadd.f32 %v363, %v626
      %v717 = vadd.f32 %v364, %v629
      %v718 = vadd.f32 %v365, %v634
      %v719 = vadd.f32 %v366, %v637
      %v720 = vadd.f32 %v367, %v642
      %v721 = vadd.f32 %v368, %v645
      %v722 = vadd.f32 %v369, %v650
      %v723 = vadd.f32 %v370, %v653
      %v724 = vadd.f32 %v371, %v658
      %v725 = vadd.f32 %v372, %v661
      %v726 = vadd.f32 %v373, %v666
      %v727 = vadd.f32 %v374, %v669
      %v728 = vadd.f32 %v375, %v674
      %v729 = vadd.f32 %v376, %v677
      %v730 = vadd.f32 %v377, %v682
      %v731 = vadd.f32 %v378, %v685
      %v732 = vadd.f32 %v379, %v690
      %v733 = vadd.f32 %v380, %v693
      %v734 = vadd.f32 %v381, %v698
      %v735 = vadd.f32 %v382, %v701
      %736 = vst [vmem:[#allocation2] sm:$0xff] %v704
      %737 = vst [vmem:[#allocation2 + $0x8] sm:$0xff] %v705
      %738 = vst [vmem:[#allocation2 + $0x10] sm:$0xff] %v706
      %739 = vst [vmem:[#allocation2 + $0x18] sm:$0xff] %v707
      %740 = vst [vmem:[#allocation2 + $0x20] sm:$0xff] %v708
      %741 = vst [vmem:[#allocation2 + $0x28] sm:$0xff] %v709
      %742 = vst [vmem:[#allocation2 + $0x30] sm:$0xff] %v710
      %743 = vst [vmem:[#allocation2 + $0x38] sm:$0xff] %v711
      %744 = vst [vmem:[#allocation2 + $0x40] sm:$0xff] %v712
      %745 = vst [vmem:[#allocation2 + $0x48] sm:$0xff] %v713
      %746 = vst [vmem:[#allocation2 + $0x50] sm:$0xff] %v714
      %747 = vst [vmem:[#allocation2 + $0x58] sm:$0xff] %v715
      %748 = vst [vmem:[#allocation2 + $0x60] sm:$0xff] %v716
      %749 = vst [vmem:[#allocation2 + $0x68] sm:$0xff] %v717
      %750 = vst [vmem:[#allocation2 + $0x70] sm:$0xff] %v718
      %751 = vst [vmem:[#allocation2 + $0x78] sm:$0xff] %v719
      %752 = vst [vmem:[#allocation2 + $0x80] sm:$0xff] %v720
      %753 = vst [vmem:[#allocation2 + $0x88] sm:$0xff] %v721
      %754 = vst [vmem:[#allocation2 + $0x90] sm:$0xff] %v722
      %755 = vst [vmem:[#allocation2 + $0x98] sm:$0xff] %v723
      %756 = vst [vmem:[#allocation2 + $0xa0] sm:$0xff] %v724
      %757 = vst [vmem:[#allocation2 + $0xa8] sm:$0xff] %v725
      %758 = vst [vmem:[#allocation2 + $0xb0] sm:$0xff] %v726
      %759 = vst [vmem:[#allocation2 + $0xb8] sm:$0xff] %v727
      %760 = vst [vmem:[#allocation2 + $0xc0] sm:$0xff] %v728
      %761 = vst [vmem:[#allocation2 + $0xc8] sm:$0xff] %v729
      %762 = vst [vmem:[#allocation2 + $0xd0] sm:$0xff] %v730
      %763 = vst [vmem:[#allocation2 + $0xd8] sm:$0xff] %v731
      %764 = vst [vmem:[#allocation2 + $0xe0] sm:$0xff] %v732
      %765 = vst [vmem:[#allocation2 + $0xe8] sm:$0xff] %v733
      %766 = vst [vmem:[#allocation2 + $0xf0] sm:$0xff] %v734
      %767 = vst [vmem:[#allocation2 + $0xf8] sm:$0xff] %v735
      // Predicated region
      $region41: #{conv2d_module_forward.1} parent=35 // pred_check
        %p768 = pneg %p283
      $region42: #{conv2d_module_forward.1} parent=35 // pred_check_branch
        %770 = sbr.rel (%p768) target = $region44
      $region43: #{conv2d_module_forward.1} parent=35 // pred_region
        %v771 = vld [vmem:[#allocation2] sm:$0xff]
        %v772 = vld [vmem:[#allocation2 + $0x8] sm:$0xff]
        %v773 = vld [vmem:[#allocation2 + $0x10] sm:$0xff]
        %v774 = vld [vmem:[#allocation2 + $0x18] sm:$0xff]
        %v775 = vld [vmem:[#allocation2 + $0x20] sm:$0xff]
        %v776 = vld [vmem:[#allocation2 + $0x28] sm:$0xff]
        %v777 = vld [vmem:[#allocation2 + $0x30] sm:$0xff]
        %v778 = vld [vmem:[#allocation2 + $0x38] sm:$0xff]
        %v779 = vld [vmem:[#allocation2 + $0x40] sm:$0xff]
        %v780 = vld [vmem:[#allocation2 + $0x48] sm:$0xff]
        %v781 = vld [vmem:[#allocation2 + $0x50] sm:$0xff]
        %v782 = vld [vmem:[#allocation2 + $0x58] sm:$0xff]
        %v783 = vld [vmem:[#allocation2 + $0x60] sm:$0xff]
        %v784 = vld [vmem:[#allocation2 + $0x68] sm:$0xff]
        %v785 = vld [vmem:[#allocation2 + $0x70] sm:$0xff]
        %v786 = vld [vmem:[#allocation2 + $0x78] sm:$0xff]
        %v787 = vld [vmem:[#allocation2 + $0x80] sm:$0xff]
        %v788 = vld [vmem:[#allocation2 + $0x88] sm:$0xff]
        %v789 = vld [vmem:[#allocation2 + $0x90] sm:$0xff]
        %v790 = vld [vmem:[#allocation2 + $0x98] sm:$0xff]
        %v791 = vld [vmem:[#allocation2 + $0xa0] sm:$0xff]
        %v792 = vld [vmem:[#allocation2 + $0xa8] sm:$0xff]
        %v793 = vld [vmem:[#allocation2 + $0xb0] sm:$0xff]
        %v794 = vld [vmem:[#allocation2 + $0xb8] sm:$0xff]
        %v795 = vld [vmem:[#allocation2 + $0xc0] sm:$0xff]
        %v796 = vld [vmem:[#allocation2 + $0xc8] sm:$0xff]
        %v797 = vld [vmem:[#allocation2 + $0xd0] sm:$0xff]
        %v798 = vld [vmem:[#allocation2 + $0xd8] sm:$0xff]
        %v799 = vld [vmem:[#allocation2 + $0xe0] sm:$0xff]
        %v800 = vld [vmem:[#allocation2 + $0xe8] sm:$0xff]
        %v801 = vld [vmem:[#allocation2 + $0xf0] sm:$0xff]
        %v802 = vld [vmem:[#allocation2 + $0xf8] sm:$0xff]
        %v803 = vld [vmem:[%s2] sm:$0x1]
        %v805 = vlaneseq
        %v806 = vshrl.u32 %v805, 7
        %v807 = vsub.s32 0, %v806
        %v808 = vrot.slane %v803, %v807
        %v810 = vmul.f32 %v771, %v808
        %v811 = vmul.f32 %v772, %v808
        %v812 = vmul.f32 %v773, %v808
        %v813 = vmul.f32 %v774, %v808
        %v814 = vmul.f32 %v775, %v808
        %v815 = vmul.f32 %v776, %v808
        %v816 = vmul.f32 %v777, %v808
        %v817 = vmul.f32 %v778, %v808
        %v818 = vmul.f32 %v779, %v808
        %v819 = vmul.f32 %v780, %v808
        %v820 = vmul.f32 %v781, %v808
        %v821 = vmul.f32 %v782, %v808
        %v822 = vmul.f32 %v783, %v808
        %v823 = vmul.f32 %v784, %v808
        %v824 = vmul.f32 %v785, %v808
        %v825 = vmul.f32 %v786, %v808
        %v826 = vmul.f32 %v787, %v808
        %v827 = vmul.f32 %v788, %v808
        %v828 = vmul.f32 %v789, %v808
        %v829 = vmul.f32 %v790, %v808
        %v830 = vmul.f32 %v791, %v808
        %v831 = vmul.f32 %v792, %v808
        %v832 = vmul.f32 %v793, %v808
        %v833 = vmul.f32 %v794, %v808
        %v834 = vmul.f32 %v795, %v808
        %v835 = vmul.f32 %v796, %v808
        %v836 = vmul.f32 %v797, %v808
        %v837 = vmul.f32 %v798, %v808
        %v838 = vmul.f32 %v799, %v808
        %v839 = vmul.f32 %v800, %v808
        %v840 = vmul.f32 %v801, %v808
        %v841 = vmul.f32 %v802, %v808
        %v842 = vld [vmem:[%s3] sm:$0x1]
        %v844 = vlaneseq
        %v845 = vshrl.u32 %v844, 7
        %v846 = vsub.s32 0, %v845
        %v847 = vrot.slane %v842, %v846
        %v849 = vadd.f32 %v810, %v847
        %v850 = vadd.f32 %v811, %v847
        %v851 = vadd.f32 %v812, %v847
        %v852 = vadd.f32 %v813, %v847
        %v853 = vadd.f32 %v814, %v847
        %v854 = vadd.f32 %v815, %v847
        %v855 = vadd.f32 %v816, %v847
        %v856 = vadd.f32 %v817, %v847
        %v857 = vadd.f32 %v818, %v847
        %v858 = vadd.f32 %v819, %v847
        %v859 = vadd.f32 %v820, %v847
        %v860 = vadd.f32 %v821, %v847
        %v861 = vadd.f32 %v822, %v847
        %v862 = vadd.f32 %v823, %v847
        %v863 = vadd.f32 %v824, %v847
        %v864 = vadd.f32 %v825, %v847
        %v865 = vadd.f32 %v826, %v847
        %v866 = vadd.f32 %v827, %v847
        %v867 = vadd.f32 %v828, %v847
        %v868 = vadd.f32 %v829, %v847
        %v869 = vadd.f32 %v830, %v847
        %v870 = vadd.f32 %v831, %v847
        %v871 = vadd.f32 %v832, %v847
        %v872 = vadd.f32 %v833, %v847
        %v873 = vadd.f32 %v834, %v847
        %v874 = vadd.f32 %v835, %v847
        %v875 = vadd.f32 %v836, %v847
        %v876 = vadd.f32 %v837, %v847
        %v877 = vadd.f32 %v838, %v847
        %v878 = vadd.f32 %v839, %v847
        %v879 = vadd.f32 %v840, %v847
        %v880 = vadd.f32 %v841, %v847
        %v881 = vmax.f32 %v849, 0.0
        %v882 = vmax.f32 %v850, 0.0
        %v883 = vmax.f32 %v851, 0.0
        %v884 = vmax.f32 %v852, 0.0
        %v885 = vmax.f32 %v853, 0.0
        %v886 = vmax.f32 %v854, 0.0
        %v887 = vmax.f32 %v855, 0.0
        %v888 = vmax.f32 %v856, 0.0
        %v889 = vmax.f32 %v857, 0.0
        %v890 = vmax.f32 %v858, 0.0
        %v891 = vmax.f32 %v859, 0.0
        %v892 = vmax.f32 %v860, 0.0
        %v893 = vmax.f32 %v861, 0.0
        %v894 = vmax.f32 %v862, 0.0
        %v895 = vmax.f32 %v863, 0.0
        %v896 = vmax.f32 %v864, 0.0
        %v897 = vmax.f32 %v865, 0.0
        %v898 = vmax.f32 %v866, 0.0
        %v899 = vmax.f32 %v867, 0.0
        %v900 = vmax.f32 %v868, 0.0
        %v901 = vmax.f32 %v869, 0.0
        %v902 = vmax.f32 %v870, 0.0
        %v903 = vmax.f32 %v871, 0.0
        %v904 = vmax.f32 %v872, 0.0
        %v905 = vmax.f32 %v873, 0.0
        %v906 = vmax.f32 %v874, 0.0
        %v907 = vmax.f32 %v875, 0.0
        %v908 = vmax.f32 %v876, 0.0
        %v909 = vmax.f32 %v877, 0.0
        %v910 = vmax.f32 %v878, 0.0
        %v911 = vmax.f32 %v879, 0.0
        %v912 = vmax.f32 %v880, 0.0
        %v913 = vpack.c.bf16 %v882, %v881
        %v914 = vpack.c.bf16 %v884, %v883
        %v915 = vpack.c.bf16 %v886, %v885
        %v916 = vpack.c.bf16 %v888, %v887
        %v917 = vpack.c.bf16 %v890, %v889
        %v918 = vpack.c.bf16 %v892, %v891
        %v919 = vpack.c.bf16 %v894, %v893
        %v920 = vpack.c.bf16 %v896, %v895
        %v921 = vpack.c.bf16 %v898, %v897
        %v922 = vpack.c.bf16 %v900, %v899
        %v923 = vpack.c.bf16 %v902, %v901
        %v924 = vpack.c.bf16 %v904, %v903
        %v925 = vpack.c.bf16 %v906, %v905
        %v926 = vpack.c.bf16 %v908, %v907
        %v927 = vpack.c.bf16 %v910, %v909
        %v928 = vpack.c.bf16 %v912, %v911
        %v945 = vunpack.c.l.b16 %v913
        %v946 = vunpack.c.h.b16 %v913
        %v947 = vunpack.c.l.b16 %v914
        %v948 = vunpack.c.h.b16 %v914
        %v949 = vunpack.c.l.b16 %v915
        %v950 = vunpack.c.h.b16 %v915
        %v951 = vunpack.c.l.b16 %v916
        %v952 = vunpack.c.h.b16 %v916
        %v953 = vunpack.c.l.b16 %v917
        %v954 = vunpack.c.h.b16 %v917
        %v955 = vunpack.c.l.b16 %v918
        %v956 = vunpack.c.h.b16 %v918
        %v957 = vunpack.c.l.b16 %v919
        %v958 = vunpack.c.h.b16 %v919
        %v959 = vunpack.c.l.b16 %v920
        %v960 = vunpack.c.h.b16 %v920
        %v961 = vunpack.c.l.b16 %v921
        %v962 = vunpack.c.h.b16 %v921
        %v963 = vunpack.c.l.b16 %v922
        %v964 = vunpack.c.h.b16 %v922
        %v965 = vunpack.c.l.b16 %v923
        %v966 = vunpack.c.h.b16 %v923
        %v967 = vunpack.c.l.b16 %v924
        %v968 = vunpack.c.h.b16 %v924
        %v969 = vunpack.c.l.b16 %v925
        %v970 = vunpack.c.h.b16 %v925
        %v971 = vunpack.c.l.b16 %v926
        %v972 = vunpack.c.h.b16 %v926
        %v973 = vunpack.c.l.b16 %v927
        %v974 = vunpack.c.h.b16 %v927
        %v975 = vunpack.c.l.b16 %v928
        %v976 = vunpack.c.h.b16 %v928
        %v977 = vpack.c.b16 %v945, %v945
        %v978 = vpack.c.b16 %v946, %v946
        %v979 = vpack.c.b16 %v947, %v947
        %v980 = vpack.c.b16 %v948, %v948
        %v981 = vpack.c.b16 %v949, %v949
        %v982 = vpack.c.b16 %v950, %v950
        %v983 = vpack.c.b16 %v951, %v951
        %v984 = vpack.c.b16 %v952, %v952
        %v985 = vpack.c.b16 %v953, %v953
        %v986 = vpack.c.b16 %v954, %v954
        %v987 = vpack.c.b16 %v955, %v955
        %v988 = vpack.c.b16 %v956, %v956
        %v989 = vpack.c.b16 %v957, %v957
        %v990 = vpack.c.b16 %v958, %v958
        %v991 = vpack.c.b16 %v959, %v959
        %v992 = vpack.c.b16 %v960, %v960
        %v993 = vpack.c.b16 %v961, %v961
        %v994 = vpack.c.b16 %v962, %v962
        %v995 = vpack.c.b16 %v963, %v963
        %v996 = vpack.c.b16 %v964, %v964
        %v997 = vpack.c.b16 %v965, %v965
        %v998 = vpack.c.b16 %v966, %v966
        %v999 = vpack.c.b16 %v967, %v967
        %v1000 = vpack.c.b16 %v968, %v968
        %v1001 = vpack.c.b16 %v969, %v969
        %v1002 = vpack.c.b16 %v970, %v970
        %v1003 = vpack.c.b16 %v971, %v971
        %v1004 = vpack.c.b16 %v972, %v972
        %v1005 = vpack.c.b16 %v973, %v973
        %v1006 = vpack.c.b16 %v974, %v974
        %v1007 = vpack.c.b16 %v975, %v975
        %v1008 = vpack.c.b16 %v976, %v976
        %1041 = vst [vmem:[%s280] sm:$0xf] %v977
        %1042 = vst [vmem:[%s280 + $0x4] sm:$0xf] %v978
        %1043 = vst [vmem:[%s280 + $0x8] sm:$0xf] %v979
        %1044 = vst [vmem:[%s280 + $0xc] sm:$0xf] %v980
        %1045 = vst [vmem:[%s280 + $0x10] sm:$0xf] %v981
        %1046 = vst [vmem:[%s280 + $0x14] sm:$0xf] %v982
        %1047 = vst [vmem:[%s280 + $0x18] sm:$0xf] %v983
        %1048 = vst [vmem:[%s280 + $0x1c] sm:$0xf] %v984
        %1049 = vst [vmem:[%s280 + $0x20] sm:$0xf] %v985
        %1050 = vst [vmem:[%s280 + $0x24] sm:$0xf] %v986
        %1051 = vst [vmem:[%s280 + $0x28] sm:$0xf] %v987
        %1052 = vst [vmem:[%s280 + $0x2c] sm:$0xf] %v988
        %1053 = vst [vmem:[%s280 + $0x30] sm:$0xf] %v989
        %1054 = vst [vmem:[%s280 + $0x34] sm:$0xf] %v990
        %1055 = vst [vmem:[%s280 + $0x38] sm:$0xf] %v991
        %1056 = vst [vmem:[%s280 + $0x3c] sm:$0xf] %v992
        %1057 = vst [vmem:[%s280 + $0x40] sm:$0xf] %v993
        %1058 = vst [vmem:[%s280 + $0x44] sm:$0xf] %v994
        %1059 = vst [vmem:[%s280 + $0x48] sm:$0xf] %v995
        %1060 = vst [vmem:[%s280 + $0x4c] sm:$0xf] %v996
        %1061 = vst [vmem:[%s280 + $0x50] sm:$0xf] %v997
        %1062 = vst [vmem:[%s280 + $0x54] sm:$0xf] %v998
        %1063 = vst [vmem:[%s280 + $0x58] sm:$0xf] %v999
        %1064 = vst [vmem:[%s280 + $0x5c] sm:$0xf] %v1000
        %1065 = vst [vmem:[%s280 + $0x60] sm:$0xf] %v1001
        %1066 = vst [vmem:[%s280 + $0x64] sm:$0xf] %v1002
        %1067 = vst [vmem:[%s280 + $0x68] sm:$0xf] %v1003
        %1068 = vst [vmem:[%s280 + $0x6c] sm:$0xf] %v1004
        %1069 = vst [vmem:[%s280 + $0x70] sm:$0xf] %v1005
        %1070 = vst [vmem:[%s280 + $0x74] sm:$0xf] %v1006
        %1071 = vst [vmem:[%s280 + $0x78] sm:$0xf] %v1007
        %1072 = vst [vmem:[%s280 + $0x7c] sm:$0xf] %v1008
      $region44: #{conv2d_module_forward.1} parent=35 // pred_fallthru
        _
      %s1073 = smul.u32 16, %s21
      %p1074 = scmp.lt.s32.totalorder %s20, 1
      %s1075 = scalar_select %p1074, %s20, 1
      %p1076 = scmp.lt.s32.totalorder %s1073, 15
      %s1077 = scalar_select %p1076, %s1073, 15
      %s1078 = smul.addr %s1077, 2
      %s1079 = smul.addr %s1075, 32
      %s1080 = sadd.s32 %s1078, %s1079
      %s1081 = smul.addr %s1080, 4
      %s1082 = scalar_lea.vmem %s4, %s1081
      // Predicated region
      $region45: #{conv2d_module_forward.1} parent=35 // pred_check
        %p1083 = pneg %p152
      $region46: #{conv2d_module_forward.1} parent=35 // pred_check_branch
        %1085 = sbr.rel (%p1083) target = $region48
      $region47: #{conv2d_module_forward.1} parent=35 // pred_region
        %s1086 = smul.u32 16, %s21
      $region48: #{conv2d_module_forward.1} parent=35 // pred_fallthru
        _
    $region36: #{conv2d_module_forward.1} parent=5 // pred_fallthru
      _
    %p1087 = scmp.le.s32.totalorder 2, %s10
    // Predicated region
    $region49: #{conv2d_module_forward.1} parent=5 // pred_check
      %p1088 = pneg %p1087
    $region50: #{conv2d_module_forward.1} parent=5 // pred_check_branch
      %1090 = sbr.rel (%p1088) target = $region52
    $region51: #{conv2d_module_forward.1} parent=5 // pred_region
      %s1091 = ssub.s32 %s10, 2
      // Predicated region
      $region53: #{conv2d_module_forward.1} parent=51 // pred_check
        %p1092 = pneg %p158
      $region54: #{conv2d_module_forward.1} parent=51 // pred_check_branch
        %1094 = sbr.rel (%p1092) target = $region56
      $region55: #{conv2d_module_forward.1} parent=51 // pred_region
        %s1095 = smul.u32 16, %s24
        %p1096 = scmp.lt.s32.totalorder %s23, 1
        %s1097 = scalar_select %p1096, %s23, 1
        %p1098 = scmp.lt.s32.totalorder %s1095, 15
        %s1099 = scalar_select %p1098, %s1095, 15
        %s1100 = smul.addr %s1099, 2
        %s1101 = smul.addr %s1097, 32
        %s1102 = sadd.s32 %s1100, %s1101
        %s1103 = smul.addr %s1102, 4
        %s1104 = scalar_lea.vmem %s4, %s1103
      $region56: #{conv2d_module_forward.1} parent=51 // pred_fallthru
        _
    $region52: #{conv2d_module_forward.1} parent=5 // pred_fallthru
      _
  $region6: #{conv2d_module_forward.1} parent=0 // loop_footer
    %s14 = sadd.s32 1, %s10
  $region7: #{conv2d_module_forward.1} parent=0 // loop_footer_branch
    %9 = sbr.rel target = $region3
  $region8: #{conv2d_module_forward.1} parent=0 // loop_exit
    _

</llo_original>
